<compile_context>
chip_gen: v6e
topology: v6e:2x2x1
jax: 0.10.0
libtpu: 0.0.40
codegen_flags: <defaults>
</compile_context>

<pallas_src>
import functools

import jax
import jax.numpy as jnp
from jax.experimental import pallas as pl
from jax.experimental.pallas import tpu as pltpu

_LANE = 128   # lane width of a vreg
_SUB = 8      # sublane count of a vreg


def _round_up(n, m):
    return ((n + m - 1) // m) * m


# ---------------------------------------------------------------------------
# Kernel
# ---------------------------------------------------------------------------
def _mlp_kernel(x_ref, p_ref, o_ref, *, lp):
    """Fused 3-layer MLP.

    x_ref: [TB, 1]  f32 batch tile
    p_ref: [2*lp+32, lp] f32 packed parameter slab (VMEM-resident):
        rows [0]            : w1 row   (Linear(1,H) weight, lane-padded)
        rows [8]            : b1
        rows [16, 16+lp)    : w2       (H x H, padded to lp x lp)
        rows [16+lp]        : b2
        rows [24+lp, 24+2lp): w3       (H x C, padded to lp x lp)
        rows [24+2lp]       : b3
    o_ref: [TB, lp] f32 lane-dense output (cols >= class_num are zero)
    """
    w1_row = 0
    b1_row = 8
    w2_row = 16
    b2_row = 16 + lp
    w3_row = 24 + lp
    b3_row = 24 + 2 * lp

    x = x_ref[...]                                     # [TB, 1]

    # Layer 1: Linear(1, H) is an outer product -> pure VPU broadcast
    # multiply + bias add, no MXU pass needed.
    w1 = p_ref[w1_row:w1_row + 1, :]                   # [1, lp]
    b1 = p_ref[b1_row:b1_row + 1, :]                   # [1, lp]
    h1 = jnp.maximum(x * w1 + b1, 0.0)                 # [TB, lp]

    # Layer 2: [TB, lp] @ [lp, lp] on the MXU (lane-dense).
    w2 = p_ref[w2_row:w2_row + lp, :]                  # [lp, lp]
    b2 = p_ref[b2_row:b2_row + 1, :]                   # [1, lp]
    h2 = jnp.maximum(
        jnp.dot(h1, w2, preferred_element_type=jnp.float32) + b2, 0.0)

    # Layer 3: [TB, lp] @ [lp, lp] -> lane-dense 128-wide output store.
    w3 = p_ref[w3_row:w3_row + lp, :]                  # [lp, lp]
    b3 = p_ref[b3_row:b3_row + 1, :]                   # [1, lp]
    out = jnp.dot(h2, w3, preferred_element_type=jnp.float32) + b3
    o_ref[...] = out.astype(o_ref.dtype)


# ---------------------------------------------------------------------------
# Parameter packing (wrapper-side, plain JAX)
# ---------------------------------------------------------------------------
def pack_params(params, hidden_size, class_num):
    """Zero-pad all params to `lp` lanes and pack into one f32 slab.

    Zero padding is exact: padded hidden units get w=0, b=0 -> relu(0)=0 and
    contribute nothing downstream; padded output columns are 0 and sliced off.
    """
    lp = _round_up(max(hidden_size, class_num, _LANE), _LANE)
    total_rows = 32 + 2 * lp
    h, c = hidden_size, class_num

    w1, b1 = params["w1"], params["b1"]   # [1, H], [1, H]
    w2, b2 = params["w2"], params["b2"]   # [H, H], [1, H]
    w3, b3 = params["w3"], params["b3"]   # [H, C], [1, C]

    slab = jnp.zeros((total_rows, lp), jnp.float32)
    slab = slab.at[0, :h].set(w1.reshape(h))
    slab = slab.at[8, :h].set(b1.reshape(h))
    slab = slab.at[16:16 + h, :h].set(w2)
    slab = slab.at[16 + lp, :h].set(b2.reshape(h))
    slab = slab.at[24 + lp:24 + lp + h, :c].set(w3)
    slab = slab.at[24 + 2 * lp, :c].set(b3.reshape(c))
    return slab, lp


# ---------------------------------------------------------------------------
# Forward wrapper
# ---------------------------------------------------------------------------
def sin_classify_net_forward(x, params, hidden_size, class_num, *,
                             block_b=512):
    """x: [B, 1] float32. Returns [B, class_num] float32."""
    slab, lp = pack_params(params, hidden_size, class_num)
    total_rows = slab.shape[0]

    B = x.shape[0]
    tb = _round_up(min(block_b, _round_up(B, _SUB)), _SUB)
    b_pad = _round_up(B, tb)
    if b_pad != B:
        x = jnp.pad(x, ((0, b_pad - B), (0, 0)))

    out = pl.pallas_call(
        functools.partial(_mlp_kernel, lp=lp),
        out_shape=jax.ShapeDtypeStruct((b_pad, lp), jnp.float32),
        grid=(b_pad // tb,),
        in_specs=[
            # batch tile of x, indexed by the (parallel) grid axis
            pl.BlockSpec((tb, 1), lambda i: (i, 0)),
            # packed parameter slab: same block every iteration -> stays
            # VMEM-resident, one DMA total.
            pl.BlockSpec((total_rows, lp), lambda i: (0, 0)),
        ],
        out_specs=pl.BlockSpec((tb, lp), lambda i: (i, 0)),
        compiler_params=pltpu.CompilerParams(
            dimension_semantics=("parallel",)),
    )(x, slab)

    return out[:B, :class_num]


# ---------------------------------------------------------------------------
# Init + reference
# ---------------------------------------------------------------------------
def init_params(key, hidden_size, class_num):
    """Deterministic init mimicking PyTorch's default Linear init
    (uniform(-1/sqrt(fan_in), 1/sqrt(fan_in))). Stored as [in, out]."""
    keys = jax.random.split(key, 6)

    def linear(kw, kb, fan_in, fan_out):
        bound = 1.0 / jnp.sqrt(jnp.float32(fan_in))
        w = jax.random.uniform(kw, (fan_in, fan_out), jnp.float32, -bound, bound)
        b = jax.random.uniform(kb, (1, fan_out), jnp.float32, -bound, bound)
        return w, b

    w1, b1 = linear(keys[0], keys[1], 1, hidden_size)
    w2, b2 = linear(keys[2], keys[3], hidden_size, hidden_size)
    w3, b3 = linear(keys[4], keys[5], hidden_size, class_num)
    return {"w1": w1, "b1": b1, "w2": w2, "b2": b2, "w3": w3, "b3": b3}


def _reference_forward(x, p):
    h1 = jnp.maximum(x @ p["w1"] + p["b1"], 0.0)
    h2 = jnp.maximum(h1 @ p["w2"] + p["b2"], 0.0)
    return h2 @ p["w3"] + p["b3"]


if __name__ == "__main__":
    class_num = 4
    hidden_size = 32
    batch = 8

    key = jax.random.PRNGKey(0)
    k_params, k_x = jax.random.split(key)

    params = init_params(k_params, hidden_size, class_num)
    # input in [-pi, pi], shape [B, 1] as Linear(1, H) implies
    x = jax.random.uniform(k_x, (batch, 1), jnp.float32, -3.14159, 3.14159)

    out = sin_classify_net_forward(x, params, hidden_size, class_num)
    out = jax.block_until_ready(out)

    ref = _reference_forward(x, params)
    assert out.shape == (batch, class_num), out.shape
    assert jnp.allclose(out, ref, atol=1e-5, rtol=1e-5), "mismatch vs reference"

    print("KERNEL_OK")
</pallas_src>

<mosaic_0001>
module attributes {stable_mosaic.version = 11 : i64} {
  func.func @_mlp_kernel(%arg0: i32, %arg1: memref<8x1xf32, #tpu.memory_space<vmem>>, %arg2: memref<288x128xf32, #tpu.memory_space<vmem>>, %arg3: memref<8x128xf32, #tpu.memory_space<vmem>>) attributes {dimension_semantics = [#tpu.dimension_semantics<parallel>], iteration_bounds = array<i64: 1>, scalar_prefetch = 0 : i64, scratch_operands = 0 : i64, tpu.core_type = #tpu.core_type<tc>, window_params = [{transform_indices = @transform_0, window_bounds = array<i64: 8, 1>}, {pipeline_mode = #tpu.pipeline_mode<synchronous>, transform_indices = @transform_1, window_bounds = array<i64: 288, 128>}, {transform_indices = @transform_2, window_bounds = array<i64: 8, 128>}]} {
    %c0 = arith.constant 0 : index
    %c0_0 = arith.constant 0 : index
    %0 = vector.load %arg1[%c0, %c0_0] : memref<8x1xf32, #tpu.memory_space<vmem>>, vector<8x1xf32>
    %c0_1 = arith.constant 0 : index
    %c0_2 = arith.constant 0 : index
    %1 = vector.load %arg2[%c0_1, %c0_2] : memref<288x128xf32, #tpu.memory_space<vmem>>, vector<1x128xf32>
    %c8 = arith.constant 8 : index
    %c0_3 = arith.constant 0 : index
    %2 = vector.load %arg2[%c8, %c0_3] : memref<288x128xf32, #tpu.memory_space<vmem>>, vector<1x128xf32>
    %3 = vector.broadcast %0 : vector<8x1xf32> to vector<8x128xf32>
    %4 = vector.broadcast %1 : vector<1x128xf32> to vector<8x128xf32>
    %5 = arith.mulf %3, %4 : vector<8x128xf32>
    %6 = vector.broadcast %2 : vector<1x128xf32> to vector<8x128xf32>
    %7 = arith.addf %5, %6 : vector<8x128xf32>
    %cst = arith.constant 0.000000e+00 : f32
    %8 = vector.broadcast %cst : f32 to vector<8x128xf32>
    %9 = arith.maximumf %7, %8 : vector<8x128xf32>
    %c16 = arith.constant 16 : index
    %c0_4 = arith.constant 0 : index
    %10 = vector.load %arg2[%c16, %c0_4] : memref<288x128xf32, #tpu.memory_space<vmem>>, vector<128x128xf32>
    %c144 = arith.constant 144 : index
    %c0_5 = arith.constant 0 : index
    %11 = vector.load %arg2[%c144, %c0_5] : memref<288x128xf32, #tpu.memory_space<vmem>>, vector<1x128xf32>
    %cst_6 = arith.constant dense<0.000000e+00> : vector<8x128xf32>
    %12 = tpu.matmul %9, %10, %cst_6 {dimension_numbers = #tpu.dot_dimension_numbers<[1], [0], [0], [1], [0, 0, 1, 1], [], []>} : vector<8x128xf32>, vector<128x128xf32>, vector<8x128xf32> -> vector<8x128xf32>
    %13 = vector.broadcast %11 : vector<1x128xf32> to vector<8x128xf32>
    %14 = arith.addf %12, %13 : vector<8x128xf32>
    %cst_7 = arith.constant 0.000000e+00 : f32
    %15 = vector.broadcast %cst_7 : f32 to vector<8x128xf32>
    %16 = arith.maximumf %14, %15 : vector<8x128xf32>
    %c152 = arith.constant 152 : index
    %c0_8 = arith.constant 0 : index
    %17 = vector.load %arg2[%c152, %c0_8] : memref<288x128xf32, #tpu.memory_space<vmem>>, vector<128x128xf32>
    %c280 = arith.constant 280 : index
    %c0_9 = arith.constant 0 : index
    %18 = vector.load %arg2[%c280, %c0_9] : memref<288x128xf32, #tpu.memory_space<vmem>>, vector<1x128xf32>
    %cst_10 = arith.constant dense<0.000000e+00> : vector<8x128xf32>
    %19 = tpu.matmul %16, %17, %cst_10 {dimension_numbers = #tpu.dot_dimension_numbers<[1], [0], [0], [1], [0, 0, 1, 1], [], []>} : vector<8x128xf32>, vector<128x128xf32>, vector<8x128xf32> -> vector<8x128xf32>
    %20 = vector.broadcast %18 : vector<1x128xf32> to vector<8x128xf32>
    %21 = arith.addf %19, %20 : vector<8x128xf32>
    %c0_11 = arith.constant 0 : index
    %c0_12 = arith.constant 0 : index
    %22 = vector.load %arg3[%c0_11, %c0_12] : memref<8x128xf32, #tpu.memory_space<vmem>>, vector<8x128xf32>
    tpu.vector_store %arg3[%c0_11, %c0_12], %21 {strides = array<i32>} : memref<8x128xf32, #tpu.memory_space<vmem>>, vector<8x128xf32>,
    return
  }
  func.func @transform_0(%arg0: i32) -> (i32, i32) {
    %c0_i32 = arith.constant 0 : i32
    %c0_i32_0 = arith.constant 0 : i32
    return %arg0, %c0_i32 : i32, i32
  }
  func.func @transform_1(%arg0: i32) -> (i32, i32) {
    %c0_i32 = arith.constant 0 : i32
    %c0_i32_0 = arith.constant 0 : i32
    %c0_i32_1 = arith.constant 0 : i32
    return %c0_i32, %c0_i32_0 : i32, i32
  }
  func.func @transform_2(%arg0: i32) -> (i32, i32) {
    %c0_i32 = arith.constant 0 : i32
    %c0_i32_0 = arith.constant 0 : i32
    return %arg0, %c0_i32 : i32, i32
  }
}

</mosaic_0001>

<llo_original>
// kernel: tpu_custom_call.1
$region0: #{tpu_custom_call.1}
  #allocation0 [shape = 'u32[]', space=smem, size = 0x4, offset = 0x4, fixed_abs, tag = 'smem constant byte address 0x4 - core index']
  #allocation1 [shape = 'u32[144,128]{1,0:T(1,128)}', space=vmem, size = 0x12000, scoped, tag = 'internal scratch']
  %s0 = inlined_call_operand.vmem [shape: f32[8,1], index: 0, kind: input, shape index: {}]
  %s1 = inlined_call_operand.hbm [shape: f32[288,128], index: 1, kind: input, shape index: {}]
  %s2 = inlined_call_operand.hbm [shape: f32[8,128], index: 2, kind: output, shape index: {}]
  %s3 = sld [smem:[#allocation0]]
  $region22: #{tpu_custom_call.1} parent=0
    _
  %s5 = ssub.s32 1, %s3
  %s6 = scalar_select 0, %s5, %s3
  $region1: #{tpu_custom_call.1} parent=0
    #allocation2 [shape = 'u8[147456]{0}', space=vmem, size = 0x24000, scoped, tag = 'input window, operand 1, single buffered']
    #allocation3 [shape = 's32[1]{0}', space=sflag, size = 0x4, scoped, tag = 'scoped memory for tpu_custom_call.1']
    #allocation4 [shape = 's32[1]{0}', space=sflag, size = 0x4, scoped, tag = 'scoped memory for tpu_custom_call.1']
    #allocation5 [shape = 'u8[4096]{0}', space=vmem, size = 0x1000, scoped, tag = 'output window, operand 0, single buffered']
    %7 = vsyncpa [#allocation3], 0
    %8 = vsyncpa [#allocation4], 0
    // Predicated region
    $region2: #{tpu_custom_call.1} parent=1 // pred_check
      _
    $region3: #{tpu_custom_call.1} parent=1 // pred_check_branch
      %10 = sbr.rel (0) target = $region5
    $region4: #{tpu_custom_call.1} parent=1 // pred_region
      _
    $region5: #{tpu_custom_call.1} parent=1 // pred_fallthru
      _
    // Predicated region
    $region6: #{tpu_custom_call.1} parent=1 // pred_check
      _
    $region7: #{tpu_custom_call.1} parent=1 // pred_check_branch
      %12 = sbr.rel (0) target = $region9
    $region8: #{tpu_custom_call.1} parent=1 // pred_region
      %s14 = ssub.s32 4608, 4608
      %15 = vsyncadd [#allocation3], %s14
      %s16 = sshll.u32 [#allocation2], 4
      %s17 = int_to_ptr.vmem [resolvable:$true] %s16
      %22 = dma.hbm_to_vmem [thread:$0]  %s1, 4608, %s17, [#allocation3], 128, 128, 8
    $region9: #{tpu_custom_call.1} parent=1 // pred_fallthru
      _
    // Predicated region
    $region10: #{tpu_custom_call.1} parent=1 // pred_check
      _
    $region11: #{tpu_custom_call.1} parent=1 // pred_check_branch
      %24 = sbr.rel (0) target = $region13
    $region12: #{tpu_custom_call.1} parent=1 // pred_region
      %25 = dma.done [#allocation3], 4608
    $region13: #{tpu_custom_call.1} parent=1 // pred_fallthru
      _
    %v26 = vld [vmem:[%s0] sm:$0xff]
    %v27 = vld [vmem:[#allocation2] sm:$0x1]
    %v28 = vld [vmem:[#allocation2 + $0x8] sm:$0x1]
    %30 = vset.pattern.permute.xlu0 0
    %31 = vperm.xlu0 %30, %v26
    %v32 = vpop.permute.xlu0 %31
    %v34 = vlaneseq
    %v35 = vshrl.u32 %v34, 7
    %v36 = vsub.s32 0, %v35
    %v37 = vrot.slane %v27, %v36
    %v38 = vmul.f32 %v32, %v37
    %v39 = vlaneseq
    %v40 = vshrl.u32 %v39, 7
    %v41 = vsub.s32 0, %v40
    %v42 = vrot.slane %v28, %v41
    %v43 = vadd.f32 %v38, %v42
    %v44 = vmax.f32 %v43, 0.0
    %v45 = vld [vmem:[#allocation2 + $0x10] sm:$0xff]
    %v46 = vld [vmem:[#allocation2 + $0x18] sm:$0xff]
    %v47 = vld [vmem:[#allocation2 + $0x20] sm:$0xff]
    %v48 = vld [vmem:[#allocation2 + $0x28] sm:$0xff]
    %v49 = vld [vmem:[#allocation2 + $0x30] sm:$0xff]
    %v50 = vld [vmem:[#allocation2 + $0x38] sm:$0xff]
    %v51 = vld [vmem:[#allocation2 + $0x40] sm:$0xff]
    %v52 = vld [vmem:[#allocation2 + $0x48] sm:$0xff]
    %v53 = vld [vmem:[#allocation2 + $0x50] sm:$0xff]
    %v54 = vld [vmem:[#allocation2 + $0x58] sm:$0xff]
    %v55 = vld [vmem:[#allocation2 + $0x60] sm:$0xff]
    %v56 = vld [vmem:[#allocation2 + $0x68] sm:$0xff]
    %v57 = vld [vmem:[#allocation2 + $0x70] sm:$0xff]
    %v58 = vld [vmem:[#allocation2 + $0x78] sm:$0xff]
    %v59 = vld [vmem:[#allocation2 + $0x80] sm:$0xff]
    %v60 = vld [vmem:[#allocation2 + $0x88] sm:$0xff]
    %v61 = vld [vmem:[#allocation2 + $0x90] sm:$0x1]
    %v62 = vlaneseq
    %v63 = vshrl.u32 %v62, 7
    %v64 = vsub.s32 0, %v63
    %v65 = vrot.slane %v61, %v64
    %66 = vmatprep.subr.mxu0 0.0
    %67 = vmatpush1.msra.mxu0 %v60
    %68 = vmatprep.subr.mxu0 0.0
    %69 = vmatpush1.msra.mxu0 %v59
    %70 = vmatprep.subr.mxu0 0.0
    %71 = vmatpush1.msra.mxu0 %v58
    %72 = vmatprep.subr.mxu0 0.0
    %73 = vmatpush1.msra.mxu0 %v57
    %74 = vmatprep.subr.mxu0 0.0
    %75 = vmatpush1.msra.mxu0 %v56
    %76 = vmatprep.subr.mxu0 0.0
    %77 = vmatpush1.msra.mxu0 %v55
    %78 = vmatprep.subr.mxu0 0.0
    %79 = vmatpush1.msra.mxu0 %v54
    %80 = vmatprep.subr.mxu0 0.0
    %81 = vmatpush1.msra.mxu0 %v53
    %82 = vmatprep.subr.mxu0 0.0
    %83 = vmatpush1.msra.mxu0 %v52
    %84 = vmatprep.subr.mxu0 0.0
    %85 = vmatpush1.msra.mxu0 %v51
    %86 = vmatprep.subr.mxu0 0.0
    %87 = vmatpush1.msra.mxu0 %v50
    %88 = vmatprep.subr.mxu0 0.0
    %89 = vmatpush1.msra.mxu0 %v49
    %90 = vmatprep.subr.mxu0 0.0
    %91 = vmatpush1.msra.mxu0 %v48
    %92 = vmatprep.subr.mxu0 0.0
    %93 = vmatpush1.msra.mxu0 %v47
    %94 = vmatprep.subr.mxu0 0.0
    %95 = vmatpush1.msra.mxu0 %v46
    %96 = vmatprep.subr.mxu0 0.0
    %97 = vmatpush1.msra.mxu0 %v45
    %98 = vmatprep.subr.mxu0 0.0
    %99 = vmatpush2.msra.mxu0 0.0
    %100 = vmatprep.subr.mxu0 0.0
    %101 = vmatpush2.msra.mxu0 0.0
    %102 = vmatprep.subr.mxu0 0.0
    %103 = vmatpush2.msra.mxu0 0.0
    %104 = vmatprep.subr.mxu0 0.0
    %105 = vmatpush2.msra.mxu0 0.0
    %106 = vmatprep.subr.mxu0 0.0
    %107 = vmatpush2.msra.mxu0 0.0
    %108 = vmatprep.subr.mxu0 0.0
    %109 = vmatpush2.msra.mxu0 0.0
    %110 = vmatprep.subr.mxu0 0.0
    %111 = vmatpush2.msra.mxu0 0.0
    %112 = vmatprep.subr.mxu0 0.0
    %113 = vmatpush2.msra.mxu0 0.0
    %114 = vmatprep.subr.mxu0 0.0
    %115 = vmatpush2.msra.mxu0 0.0
    %116 = vmatprep.subr.mxu0 0.0
    %117 = vmatpush2.msra.mxu0 0.0
    %118 = vmatprep.subr.mxu0 0.0
    %119 = vmatpush2.msra.mxu0 0.0
    %120 = vmatprep.subr.mxu0 0.0
    %121 = vmatpush2.msra.mxu0 0.0
    %122 = vmatprep.subr.mxu0 0.0
    %123 = vmatpush2.msra.mxu0 0.0
    %124 = vmatprep.subr.mxu0 0.0
    %125 = vmatpush2.msra.mxu0 0.0
    %126 = vmatprep.subr.mxu0 0.0
    %127 = vmatpush2.msra.mxu0 0.0
    %128 = vmatprep.subr.mxu0 0.0
    %129 = vmatpush2.msra.mxu0 0.0
    %130 = vmatprep.mubr.f32.mxu0 0.0
    %131 = vmatmul.mubr.f32.gmra.mxu0 %v44
    %v132 = vpop.f32.mrf.mxu0
    %v133 = vadd.f32 %v65, %v132
    %v134 = vpop.f32.mrf.mxu0
    %135 = vdwg.mxu0
    %v136 = vmax.f32 %v133, 0.0
    %v137 = vld [vmem:[#allocation2 + $0x98] sm:$0xff]
    %v138 = vld [vmem:[#allocation2 + $0xa0] sm:$0xff]
    %v139 = vld [vmem:[#allocation2 + $0xa8] sm:$0xff]
    %v140 = vld [vmem:[#allocation2 + $0xb0] sm:$0xff]
    %v141 = vld [vmem:[#allocation2 + $0xb8] sm:$0xff]
    %v142 = vld [vmem:[#allocation2 + $0xc0] sm:$0xff]
    %v143 = vld [vmem:[#allocation2 + $0xc8] sm:$0xff]
    %v144 = vld [vmem:[#allocation2 + $0xd0] sm:$0xff]
    %v145 = vld [vmem:[#allocation2 + $0xd8] sm:$0xff]
    %v146 = vld [vmem:[#allocation2 + $0xe0] sm:$0xff]
    %v147 = vld [vmem:[#allocation2 + $0xe8] sm:$0xff]
    %v148 = vld [vmem:[#allocation2 + $0xf0] sm:$0xff]
    %v149 = vld [vmem:[#allocation2 + $0xf8] sm:$0xff]
    %v150 = vld [vmem:[#allocation2 + $0x100] sm:$0xff]
    %v151 = vld [vmem:[#allocation2 + $0x108] sm:$0xff]
    %v152 = vld [vmem:[#allocation2 + $0x110] sm:$0xff]
    %v153 = vld [vmem:[#allocation2 + $0x118] sm:$0x1]
    %v154 = vlaneseq
    %v155 = vshrl.u32 %v154, 7
    %v156 = vsub.s32 0, %v155
    %v157 = vrot.slane %v153, %v156
    %158 = vmatprep.subr.mxu0 0.0
    %159 = vmatpush1.msra.mxu0 %v152
    %160 = vmatprep.subr.mxu0 0.0
    %161 = vmatpush1.msra.mxu0 %v151
    %162 = vmatprep.subr.mxu0 0.0
    %163 = vmatpush1.msra.mxu0 %v150
    %164 = vmatprep.subr.mxu0 0.0
    %165 = vmatpush1.msra.mxu0 %v149
    %166 = vmatprep.subr.mxu0 0.0
    %167 = vmatpush1.msra.mxu0 %v148
    %168 = vmatprep.subr.mxu0 0.0
    %169 = vmatpush1.msra.mxu0 %v147
    %170 = vmatprep.subr.mxu0 0.0
    %171 = vmatpush1.msra.mxu0 %v146
    %172 = vmatprep.subr.mxu0 0.0
    %173 = vmatpush1.msra.mxu0 %v145
    %174 = vmatprep.subr.mxu0 0.0
    %175 = vmatpush1.msra.mxu0 %v144
    %176 = vmatprep.subr.mxu0 0.0
    %177 = vmatpush1.msra.mxu0 %v143
    %178 = vmatprep.subr.mxu0 0.0
    %179 = vmatpush1.msra.mxu0 %v142
    %180 = vmatprep.subr.mxu0 0.0
    %181 = vmatpush1.msra.mxu0 %v141
    %182 = vmatprep.subr.mxu0 0.0
    %183 = vmatpush1.msra.mxu0 %v140
    %184 = vmatprep.subr.mxu0 0.0
    %185 = vmatpush1.msra.mxu0 %v139
    %186 = vmatprep.subr.mxu0 0.0
    %187 = vmatpush1.msra.mxu0 %v138
    %188 = vmatprep.subr.mxu0 0.0
    %189 = vmatpush1.msra.mxu0 %v137
    %190 = vmatprep.subr.mxu0 0.0
    %191 = vmatpush2.msra.mxu0 0.0
    %192 = vmatprep.subr.mxu0 0.0
    %193 = vmatpush2.msra.mxu0 0.0
    %194 = vmatprep.subr.mxu0 0.0
    %195 = vmatpush2.msra.mxu0 0.0
    %196 = vmatprep.subr.mxu0 0.0
    %197 = vmatpush2.msra.mxu0 0.0
    %198 = vmatprep.subr.mxu0 0.0
    %199 = vmatpush2.msra.mxu0 0.0
    %200 = vmatprep.subr.mxu0 0.0
    %201 = vmatpush2.msra.mxu0 0.0
    %202 = vmatprep.subr.mxu0 0.0
    %203 = vmatpush2.msra.mxu0 0.0
    %204 = vmatprep.subr.mxu0 0.0
    %205 = vmatpush2.msra.mxu0 0.0
    %206 = vmatprep.subr.mxu0 0.0
    %207 = vmatpush2.msra.mxu0 0.0
    %208 = vmatprep.subr.mxu0 0.0
    %209 = vmatpush2.msra.mxu0 0.0
    %210 = vmatprep.subr.mxu0 0.0
    %211 = vmatpush2.msra.mxu0 0.0
    %212 = vmatprep.subr.mxu0 0.0
    %213 = vmatpush2.msra.mxu0 0.0
    %214 = vmatprep.subr.mxu0 0.0
    %215 = vmatpush2.msra.mxu0 0.0
    %216 = vmatprep.subr.mxu0 0.0
    %217 = vmatpush2.msra.mxu0 0.0
    %218 = vmatprep.subr.mxu0 0.0
    %219 = vmatpush2.msra.mxu0 0.0
    %220 = vmatprep.subr.mxu0 0.0
    %221 = vmatpush2.msra.mxu0 0.0
    %222 = vmatprep.mubr.f32.mxu0 0.0
    %223 = vmatmul.mubr.f32.gmra.mxu0 %v136
    %v224 = vpop.f32.mrf.mxu0
    %v225 = vadd.f32 %v157, %v224
    %v226 = vpop.f32.mrf.mxu0
    %227 = vdwg.mxu0
    %228 = vst [vmem:[#allocation5] sm:$0xff] %v225
    // Predicated region
    $region14: #{tpu_custom_call.1} parent=1 // pred_check
      _
    $region15: #{tpu_custom_call.1} parent=1 // pred_check_branch
      %230 = sbr.rel (0) target = $region17
    $region16: #{tpu_custom_call.1} parent=1 // pred_region
      %s232 = ssub.s32 128, 128
      %233 = vsyncadd [#allocation4], %s232
      %s235 = sshll.u32 [#allocation5], 4
      %s236 = int_to_ptr.vmem [resolvable:$true] %s235
      %238 = dma.vmem_to_hbm [thread:$0]  %s236, 128, %s2, [#allocation4]
    $region17: #{tpu_custom_call.1} parent=1 // pred_fallthru
      _
    // Predicated region
    $region18: #{tpu_custom_call.1} parent=1 // pred_check
      _
    $region19: #{tpu_custom_call.1} parent=1 // pred_check_branch
      %240 = sbr.rel (0) target = $region21
    $region20: #{tpu_custom_call.1} parent=1 // pred_region
      %241 = dma.done [#allocation4], 128
    $region21: #{tpu_custom_call.1} parent=1 // pred_fallthru
      _
    %242 = vsyncpa [#allocation3], 1
    %243 = vsyncpa [#allocation4], 1

</llo_original>
